<compile_context>
chip_gen: v5e
topology: v5e:2x2
jax: 0.10.0
libtpu: 0.0.40
codegen_flags: <defaults>
</compile_context>

<pallas_src>
import jax
import jax.numpy as jnp
from jax.experimental import pallas as pl
from jax.experimental.pallas import tpu as pltpu


def _senet_kernel(x_ref, w1t_ref, b1_ref, w2t_ref, b2_ref, out_ref):
    # x_ref   : (B, C, HW)  -- B samples, channels in sublanes, spatial in lanes
    # w1t_ref : (C, Cr)     -- fc1.weight.T
    # b1_ref  : (1, Cr)     -- fc1.bias
    # w2t_ref : (Cr, C)     -- fc2.weight.T
    # b2_ref  : (1, C)      -- fc2.bias
    # out_ref : (B, C, HW)
    _, _, HW = x_ref.shape
    inv_hw = 1.0 / float(HW)

    # ---- squeeze: global average pool over the spatial (lane) dim, f32 accum ----
    y = jnp.sum(x_ref[...].astype(jnp.float32), axis=2) * inv_hw          # (B, C)

    # ---- excite: batched tiny MLP on the MXU (otherwise idle in this kernel) ----
    w1t = w1t_ref[...].astype(jnp.float32)                                 # (C, Cr)
    w2t = w2t_ref[...].astype(jnp.float32)                                 # (Cr, C)
    b1 = b1_ref[...].astype(jnp.float32)                                   # (1, Cr)
    b2 = b2_ref[...].astype(jnp.float32)                                   # (1, C)

    h = jnp.dot(y, w1t, preferred_element_type=jnp.float32) + b1           # (B, Cr)
    h = jnp.maximum(h, 0.0)                                                # ReLU
    z = jnp.dot(h, w2t, preferred_element_type=jnp.float32) + b2           # (B, C)

    # Exact sigmoid (exp on the EUP); keeps bit-level agreement with the reference.
    gate = 1.0 / (1.0 + jnp.exp(-z))                                       # (B, C)

    # ---- scale: re-read x from VMEM (do not hold the tile live across the MLP) ----
    x_again = x_ref[...]
    if x_again.dtype == jnp.float32:
        scaled = x_again * gate[:, :, None]
    else:
        # Narrow dtypes (e.g. bf16 on v6e/v7x): multiply in the native dtype to
        # halve vreg traffic on the read-scale-write path. Fine on v5e too
        # (compiler promotes).
        scaled = x_again * gate[:, :, None].astype(x_again.dtype)
    out_ref[...] = scaled.astype(out_ref.dtype)


def _pick_batch_block(n, c, hw, itemsize, target_tile_bytes=4 << 20):
    """Largest divisor of n whose (B, C, HW) tile stays under target_tile_bytes,
    while keeping the grid length >= 2 (both v7x TensorCores busy) when n >= 2."""
    max_b = max(1, target_tile_bytes // max(1, c * hw * itemsize))
    best = 1
    for b in range(1, n + 1):
        if n % b != 0 or b > max_b:
            continue
        if n >= 2 and n // b < 2:
            continue
        best = b
    return best


def senet_block(x_nchw, params):
    """x_nchw: (N, C, H, W). params: fc1_w (Cr,C), fc1_b (Cr,), fc2_w (C,Cr), fc2_b (C,)."""
    N, C, H, W = x_nchw.shape
    HW = H * W
    Cr = params["fc1_w"].shape[0]

    # Pure reshape (contiguous dims merged) -- no transpose, no extra HBM copy.
    x3d = x_nchw.reshape(N, C, HW)

    itemsize = jnp.dtype(x_nchw.dtype).itemsize
    B = _pick_batch_block(N, C, HW, itemsize)
    grid = (N // B,)

    # Tiny, one-off transposes of the MLP weights (hoist/cache if params are static).
    w1t = params["fc1_w"].T                     # (C, Cr)
    w2t = params["fc2_w"].T                     # (Cr, C)
    b1 = params["fc1_b"].reshape(1, Cr)
    b2 = params["fc2_b"].reshape(1, C)

    # Double-buffered in+out tiles (~4 x tile) plus params; keep v7x (64 MiB VMEM)
    # headroom. v5e/v6e (128 MiB) could go larger, but ~4 MiB tiles already sit on
    # the roofline plateau.
    tile_bytes = B * C * HW * itemsize
    vmem_limit = int(min(48 << 20, max(32 << 20, 5 * tile_bytes + (1 << 20))))

    out3d = pl.pallas_call(
        _senet_kernel,
        out_shape=jax.ShapeDtypeStruct((N, C, HW), x_nchw.dtype),
        grid=grid,
        in_specs=[
            pl.BlockSpec((B, C, HW), lambda n: (n, 0, 0)),   # B-sample tile
            pl.BlockSpec((C, Cr), lambda n: (0, 0)),         # fc1.W^T (fetched once)
            pl.BlockSpec((1, Cr), lambda n: (0, 0)),         # fc1 bias
            pl.BlockSpec((Cr, C), lambda n: (0, 0)),         # fc2.W^T (fetched once)
            pl.BlockSpec((1, C), lambda n: (0, 0)),          # fc2 bias
        ],
        out_specs=pl.BlockSpec((B, C, HW), lambda n: (n, 0, 0)),
        compiler_params=pltpu.CompilerParams(
            dimension_semantics=("parallel",),               # 2x on v7x, no-op on v5e/v6e
            vmem_limit_bytes=vmem_limit,
        ),
    )(x3d, w1t, b1, w2t, b2)

    return out3d.reshape(N, C, H, W)


def senet_reference(x, params):
    """Plain-JAX NCHW reference matching the PyTorch SENetBlock.forward."""
    y = jnp.mean(x, axis=(2, 3))                                        # (N, C)
    h = jnp.maximum(y @ params["fc1_w"].T + params["fc1_b"], 0.0)       # (N, Cr)
    g = jax.nn.sigmoid(h @ params["fc2_w"].T + params["fc2_b"])         # (N, C)
    return x * g[:, :, None, None]


if __name__ == "__main__":
    # reduction=16 (module default) => channels must be a multiple of 16.
    N, C, H, W = 2, 64, 16, 16
    reduction = 16
    Cr = C // reduction

    key = jax.random.PRNGKey(0)
    ks = jax.random.split(key, 5)
    params = {
        "fc1_w": 0.3 * jax.random.normal(ks[0], (Cr, C), jnp.float32),
        "fc1_b": 0.1 * jax.random.normal(ks[1], (Cr,), jnp.float32),
        "fc2_w": 0.3 * jax.random.normal(ks[2], (C, Cr), jnp.float32),
        "fc2_b": 0.1 * jax.random.normal(ks[3], (C,), jnp.float32),
    }
    x = jax.random.normal(ks[4], (N, C, H, W), jnp.float32)

    out = jax.block_until_ready(senet_block(x, params))
    ref = jax.block_until_ready(senet_reference(x, params))

    assert out.shape == (N, C, H, W)
    max_err = jnp.max(jnp.abs(out - ref))
    assert jnp.allclose(out, ref, rtol=1e-4, atol=1e-5), f"max abs err {max_err}"

    print("KERNEL_OK")
</pallas_src>

<mosaic_0001>
module attributes {stable_mosaic.version = 11 : i64} {
  func.func @_senet_kernel(%arg0: i32, %arg1: memref<1x64x256xf32, #tpu.memory_space<vmem>>, %arg2: memref<64x4xf32, #tpu.memory_space<vmem>>, %arg3: memref<1x4xf32, #tpu.memory_space<vmem>>, %arg4: memref<4x64xf32, #tpu.memory_space<vmem>>, %arg5: memref<1x64xf32, #tpu.memory_space<vmem>>, %arg6: memref<1x64x256xf32, #tpu.memory_space<vmem>>) attributes {dimension_semantics = [#tpu.dimension_semantics<parallel>], iteration_bounds = array<i64: 2>, scalar_prefetch = 0 : i64, scratch_operands = 0 : i64, tpu.core_type = #tpu.core_type<tc>, window_params = [{transform_indices = @transform_0, window_bounds = array<i64: 1, 64, 256>}, {pipeline_mode = #tpu.pipeline_mode<synchronous>, transform_indices = @transform_1, window_bounds = array<i64: 64, 4>}, {pipeline_mode = #tpu.pipeline_mode<synchronous>, transform_indices = @transform_2, window_bounds = array<i64: 1, 4>}, {pipeline_mode = #tpu.pipeline_mode<synchronous>, transform_indices = @transform_3, window_bounds = array<i64: 4, 64>}, {pipeline_mode = #tpu.pipeline_mode<synchronous>, transform_indices = @transform_4, window_bounds = array<i64: 1, 64>}, {transform_indices = @transform_5, window_bounds = array<i64: 1, 64, 256>}]} {
    %c0 = arith.constant 0 : index
    %c0_0 = arith.constant 0 : index
    %c0_1 = arith.constant 0 : index
    %0 = vector.load %arg1[%c0, %c0_0, %c0_1] : memref<1x64x256xf32, #tpu.memory_space<vmem>>, vector<1x64x256xf32>
    %cst = arith.constant dense<0.000000e+00> : vector<1x64xf32>
    %1 = vector.multi_reduction <add>, %0, %cst [2] : vector<1x64x256xf32> to vector<1x64xf32>
    %cst_2 = arith.constant 3.906250e-03 : f32
    %2 = vector.broadcast %cst_2 : f32 to vector<1x64xf32>
    %3 = arith.mulf %1, %2 : vector<1x64xf32>
    %c0_3 = arith.constant 0 : index
    %c0_4 = arith.constant 0 : index
    %4 = vector.load %arg2[%c0_3, %c0_4] : memref<64x4xf32, #tpu.memory_space<vmem>>, vector<64x4xf32>
    %c0_5 = arith.constant 0 : index
    %c0_6 = arith.constant 0 : index
    %5 = vector.load %arg4[%c0_5, %c0_6] : memref<4x64xf32, #tpu.memory_space<vmem>>, vector<4x64xf32>
    %c0_7 = arith.constant 0 : index
    %c0_8 = arith.constant 0 : index
    %6 = vector.load %arg3[%c0_7, %c0_8] : memref<1x4xf32, #tpu.memory_space<vmem>>, vector<1x4xf32>
    %c0_9 = arith.constant 0 : index
    %c0_10 = arith.constant 0 : index
    %7 = vector.load %arg5[%c0_9, %c0_10] : memref<1x64xf32, #tpu.memory_space<vmem>>, vector<1x64xf32>
    %cst_11 = arith.constant dense<0.000000e+00> : vector<1x4xf32>
    %8 = tpu.matmul %3, %4, %cst_11 {dimension_numbers = #tpu.dot_dimension_numbers<[1], [0], [0], [1], [0, 0, 1, 1], [], []>} : vector<1x64xf32>, vector<64x4xf32>, vector<1x4xf32> -> vector<1x4xf32>
    %9 = arith.addf %8, %6 : vector<1x4xf32>
    %cst_12 = arith.constant 0.000000e+00 : f32
    %10 = vector.broadcast %cst_12 : f32 to vector<1x4xf32>
    %11 = arith.maximumf %9, %10 : vector<1x4xf32>
    %cst_13 = arith.constant dense<0.000000e+00> : vector<1x64xf32>
    %12 = tpu.matmul %11, %5, %cst_13 {dimension_numbers = #tpu.dot_dimension_numbers<[1], [0], [0], [1], [0, 0, 1, 1], [], []>} : vector<1x4xf32>, vector<4x64xf32>, vector<1x64xf32> -> vector<1x64xf32>
    %13 = arith.addf %12, %7 : vector<1x64xf32>
    %cst_14 = arith.constant 0.000000e+00 : f32
    %14 = vector.broadcast %cst_14 : f32 to vector<1x64xf32>
    %15 = arith.subf %14, %13 : vector<1x64xf32>
    %16 = math.exp %15 : vector<1x64xf32>
    %cst_15 = arith.constant 1.000000e+00 : f32
    %17 = vector.broadcast %cst_15 : f32 to vector<1x64xf32>
    %18 = arith.addf %17, %16 : vector<1x64xf32>
    %cst_16 = arith.constant 1.000000e+00 : f32
    %19 = vector.broadcast %cst_16 : f32 to vector<1x64xf32>
    %20 = arith.divf %19, %18 : vector<1x64xf32>
    %c0_17 = arith.constant 0 : index
    %c0_18 = arith.constant 0 : index
    %c0_19 = arith.constant 0 : index
    %21 = vector.load %arg1[%c0_17, %c0_18, %c0_19] : memref<1x64x256xf32, #tpu.memory_space<vmem>>, vector<1x64x256xf32>
    %22 = vector.shape_cast %20 : vector<1x64xf32> to vector<1x64x1xf32>
    %23 = vector.broadcast %22 : vector<1x64x1xf32> to vector<1x64x256xf32>
    %24 = arith.mulf %21, %23 : vector<1x64x256xf32>
    %c0_20 = arith.constant 0 : index
    %c0_21 = arith.constant 0 : index
    %c0_22 = arith.constant 0 : index
    %25 = vector.load %arg6[%c0_20, %c0_21, %c0_22] : memref<1x64x256xf32, #tpu.memory_space<vmem>>, vector<1x64x256xf32>
    tpu.vector_store %arg6[%c0_20, %c0_21, %c0_22], %24 {strides = array<i32>} : memref<1x64x256xf32, #tpu.memory_space<vmem>>, vector<1x64x256xf32>,
    return
  }
  func.func @transform_0(%arg0: i32) -> (i32, i32, i32) {
    %c0_i32 = arith.constant 0 : i32
    %c0_i32_0 = arith.constant 0 : i32
    %c0_i32_1 = arith.constant 0 : i32
    return %arg0, %c0_i32, %c0_i32_0 : i32, i32, i32
  }
  func.func @transform_1(%arg0: i32) -> (i32, i32) {
    %c0_i32 = arith.constant 0 : i32
    %c0_i32_0 = arith.constant 0 : i32
    %c0_i32_1 = arith.constant 0 : i32
    return %c0_i32, %c0_i32_0 : i32, i32
  }
  func.func @transform_2(%arg0: i32) -> (i32, i32) {
    %c0_i32 = arith.constant 0 : i32
    %c0_i32_0 = arith.constant 0 : i32
    %c0_i32_1 = arith.constant 0 : i32
    return %c0_i32, %c0_i32_0 : i32, i32
  }
  func.func @transform_3(%arg0: i32) -> (i32, i32) {
    %c0_i32 = arith.constant 0 : i32
    %c0_i32_0 = arith.constant 0 : i32
    %c0_i32_1 = arith.constant 0 : i32
    return %c0_i32, %c0_i32_0 : i32, i32
  }
  func.func @transform_4(%arg0: i32) -> (i32, i32) {
    %c0_i32 = arith.constant 0 : i32
    %c0_i32_0 = arith.constant 0 : i32
    %c0_i32_1 = arith.constant 0 : i32
    return %c0_i32, %c0_i32_0 : i32, i32
  }
  func.func @transform_5(%arg0: i32) -> (i32, i32, i32) {
    %c0_i32 = arith.constant 0 : i32
    %c0_i32_0 = arith.constant 0 : i32
    %c0_i32_1 = arith.constant 0 : i32
    return %arg0, %c0_i32, %c0_i32_0 : i32, i32, i32
  }
}

</mosaic_0001>

<llo_original>
// kernel: tpu_custom_call.1
$region0: #{tpu_custom_call.1}
  #allocation0 [shape = 'u32[]', space=smem, size = 0x4, offset = 0x4, fixed_abs, tag = 'smem constant byte address 0x4 - core index']
  #allocation1 [shape = 'u32[72,128]{1,0:T(1,128)}', space=vmem, size = 0x9000, scoped, tag = 'internal scratch']
  %s0 = inlined_call_operand.hbm [shape: f32[2,64,256], index: 0, kind: input, shape index: {}]
  %s1 = inlined_call_operand.vmem [shape: f32[64,4], index: 1, kind: input, shape index: {}]
  %s2 = inlined_call_operand.vmem [shape: f32[1,4], index: 2, kind: input, shape index: {}]
  %s3 = inlined_call_operand.vmem [shape: f32[4,64], index: 3, kind: input, shape index: {}]
  %s4 = inlined_call_operand.vmem [shape: f32[1,64], index: 4, kind: input, shape index: {}]
  %s5 = inlined_call_operand.hbm [shape: f32[2,64,256], index: 5, kind: output, shape index: {}]
  %s6 = sld [smem:[#allocation0]]
  $region57: #{tpu_custom_call.1} parent=0
    _
  %s8 = ssub.s32 1, %s6
  %s9 = scalar_select 0, %s8, %s6
  $region1: #{tpu_custom_call.1} parent=0
    #allocation2 [shape = 'u8[131072]{0}', space=vmem, size = 0x20000, scoped, tag = 'input window, operand 0']
    #allocation3 [shape = 's32[2]{0}', space=sflag, size = 0x8, scoped, tag = 'scoped memory for tpu_custom_call.1']
    #allocation4 [shape = 's32[2]{0}', space=sflag, size = 0x8, scoped, tag = 'scoped memory for tpu_custom_call.1']
    #allocation5 [shape = 'u8[131072]{0}', space=vmem, size = 0x20000, scoped, tag = 'output window, operand 0']
    %10 = vsyncpa [#allocation3], 0
    %s11 = scalar_lea.sflag [#allocation3], 1
    %12 = vsyncpa %s11, 0
    %13 = vsyncpa [#allocation4], 0
    %s14 = scalar_lea.sflag [#allocation4], 1
    %15 = vsyncpa %s14, 0
    loop: start=0, step=1, limit=4
    $region2: #{tpu_custom_call.1} parent=1 // loop_pre_header
      _
    $region3: #{tpu_custom_call.1} parent=1 // loop_header
      %s17 = sphi 0, %s21
      %p18 = scmp.ge.s32.totalorder %s17, 4
      %s27 = sphi 0, %s29
      %s30 = sphi 0, %s27
      %s31 = sphi 0, %s30
      %s47 = sphi 0, %s31
      %s51 = sphi 0, %s51
      %s53 = sphi 0, %s51
      %s54 = sphi 0, %s53
      %s68 = sphi 0, %s54
      %s72 = sphi 0, %s72
      %s74 = sphi 0, %s72
      %s75 = sphi 0, %s74
      %s89 = sphi 0, %s75
      %s93 = sphi 0, %s93
      %s95 = sphi 0, %s93
      %s96 = sphi 0, %s95
      %s110 = sphi 0, %s96
      %s114 = sphi 0, %s114
      %s116 = sphi 0, %s114
      %s117 = sphi 0, %s116
      %s131 = sphi 0, %s117
      %s137 = sphi 0, %s139
      %s140 = sphi 0, %s137
      %s141 = sphi 0, %s140
      %s157 = sphi 0, %s141
    $region4: #{tpu_custom_call.1} parent=1 // loop_header_branch
      %20 = sbr.rel (%p18) target = $region8
    $region5: #{tpu_custom_call.1} parent=1 // loop_body
      %s22 = ssub.s32 %s17, 1
      %s23 = ssub.s32 %s17, 2
      %s24 = sadd.s32 %s17, 1
      %s25 = ssub.s32 %s17, %s24
      %p26 = scmp.eq.s32.totalorder %s25, 0
      %s28 = sadd.s32 %s27, 1
      %s29 = scalar_select %p26, %s27, %s28
      %p32 = pneg %p26
      %p33 = scmp.eq.s32.totalorder %s17, 1
      %p34 = por %p32, %p33
      %p35 = scmp.ne.s32.totalorder %s27, %s30
      %p36 = scmp.eq.s32.totalorder %s17, 0
      %p37 = por %p35, %p36
      %p38 = scmp.ne.s32.totalorder %s27, %s30
      %p39 = scmp.eq.s32.totalorder %s22, 1
      %p40 = por %p38, %p39
      %p41 = scmp.ne.s32.totalorder %s30, %s31
      %p42 = scmp.eq.s32.totalorder %s22, 0
      %p43 = por %p41, %p42
      %p44 = scmp.ne.s32.totalorder %s30, %s31
      %p45 = scmp.eq.s32.totalorder %s23, 1
      %p46 = por %p44, %p45
      %p48 = scmp.ne.s32.totalorder %s31, %s47
      %p49 = scmp.eq.s32.totalorder %s23, 0
      %p50 = por %p48, %p49
      %s52 = sadd.s32 %s51, 1
      %p55 = scmp.eq.s32.totalorder %s17, 1
      %p56 = scmp.ne.s32.totalorder %s51, %s53
      %p57 = scmp.eq.s32.totalorder %s17, 0
      %p58 = por %p56, %p57
      %p59 = scmp.ne.s32.totalorder %s51, %s53
      %p60 = scmp.eq.s32.totalorder %s22, 1
      %p61 = por %p59, %p60
      %p62 = scmp.ne.s32.totalorder %s53, %s54
      %p63 = scmp.eq.s32.totalorder %s22, 0
      %p64 = por %p62, %p63
      %p65 = scmp.ne.s32.totalorder %s53, %s54
      %p66 = scmp.eq.s32.totalorder %s23, 1
      %p67 = por %p65, %p66
      %p69 = scmp.ne.s32.totalorder %s54, %s68
      %p70 = scmp.eq.s32.totalorder %s23, 0
      %p71 = por %p69, %p70
      %s73 = sadd.s32 %s72, 1
      %p76 = scmp.eq.s32.totalorder %s17, 1
      %p77 = scmp.ne.s32.totalorder %s72, %s74
      %p78 = scmp.eq.s32.totalorder %s17, 0
      %p79 = por %p77, %p78
      %p80 = scmp.ne.s32.totalorder %s72, %s74
      %p81 = scmp.eq.s32.totalorder %s22, 1
      %p82 = por %p80, %p81
      %p83 = scmp.ne.s32.totalorder %s74, %s75
      %p84 = scmp.eq.s32.totalorder %s22, 0
      %p85 = por %p83, %p84
      %p86 = scmp.ne.s32.totalorder %s74, %s75
      %p87 = scmp.eq.s32.totalorder %s23, 1
      %p88 = por %p86, %p87
      %p90 = scmp.ne.s32.totalorder %s75, %s89
      %p91 = scmp.eq.s32.totalorder %s23, 0
      %p92 = por %p90, %p91
      %s94 = sadd.s32 %s93, 1
      %p97 = scmp.eq.s32.totalorder %s17, 1
      %p98 = scmp.ne.s32.totalorder %s93, %s95
      %p99 = scmp.eq.s32.totalorder %s17, 0
      %p100 = por %p98, %p99
      %p101 = scmp.ne.s32.totalorder %s93, %s95
      %p102 = scmp.eq.s32.totalorder %s22, 1
      %p103 = por %p101, %p102
      %p104 = scmp.ne.s32.totalorder %s95, %s96
      %p105 = scmp.eq.s32.totalorder %s22, 0
      %p106 = por %p104, %p105
      %p107 = scmp.ne.s32.totalorder %s95, %s96
      %p108 = scmp.eq.s32.totalorder %s23, 1
      %p109 = por %p107, %p108
      %p111 = scmp.ne.s32.totalorder %s96, %s110
      %p112 = scmp.eq.s32.totalorder %s23, 0
      %p113 = por %p111, %p112
      %s115 = sadd.s32 %s114, 1
      %p118 = scmp.eq.s32.totalorder %s17, 1
      %p119 = scmp.ne.s32.totalorder %s114, %s116
      %p120 = scmp.eq.s32.totalorder %s17, 0
      %p121 = por %p119, %p120
      %p122 = scmp.ne.s32.totalorder %s114, %s116
      %p123 = scmp.eq.s32.totalorder %s22, 1
      %p124 = por %p122, %p123
      %p125 = scmp.ne.s32.totalorder %s116, %s117
      %p126 = scmp.eq.s32.totalorder %s22, 0
      %p127 = por %p125, %p126
      %p128 = scmp.ne.s32.totalorder %s116, %s117
      %p129 = scmp.eq.s32.totalorder %s23, 1
      %p130 = por %p128, %p129
      %p132 = scmp.ne.s32.totalorder %s117, %s131
      %p133 = scmp.eq.s32.totalorder %s23, 0
      %p134 = por %p132, %p133
      %s135 = ssub.s32 %s17, %s24
      %p136 = scmp.eq.s32.totalorder %s135, 0
      %s138 = sadd.s32 %s137, 1
      %s139 = scalar_select %p136, %s137, %s138
      %p142 = pneg %p136
      %p143 = scmp.eq.s32.totalorder %s17, 1
      %p144 = por %p142, %p143
      %p145 = scmp.ne.s32.totalorder %s137, %s140
      %p146 = scmp.eq.s32.totalorder %s17, 0
      %p147 = por %p145, %p146
      %p148 = scmp.ne.s32.totalorder %s137, %s140
      %p149 = scmp.eq.s32.totalorder %s22, 1
      %p150 = por %p148, %p149
      %p151 = scmp.ne.s32.totalorder %s140, %s141
      %p152 = scmp.eq.s32.totalorder %s22, 0
      %p153 = por %p151, %p152
      %p154 = scmp.ne.s32.totalorder %s140, %s141
      %p155 = scmp.eq.s32.totalorder %s23, 1
      %p156 = por %p154, %p155
      %p158 = scmp.ne.s32.totalorder %s141, %s157
      %p159 = scmp.eq.s32.totalorder %s23, 0
      %p160 = por %p158, %p159
      %p161 = scmp.le.s32.totalorder 1, %s17
      %p162 = scmp.lt.s32.totalorder %s17, 3
      %p163 = pnand %p161, %p162
      %p164 = pneg %p163
      // Predicated region
      $region9: #{tpu_custom_call.1} parent=5 // pred_check
        _
      $region10: #{tpu_custom_call.1} parent=5 // pred_check_branch
        %166 = sbr.rel (%p163) target = $region12
      $region11: #{tpu_custom_call.1} parent=5 // pred_region
        %s167 = ssub.s32 %s17, 1
        // Predicated region
        $region13: #{tpu_custom_call.1} parent=11 // pred_check
          %p168 = pneg %p64
        $region14: #{tpu_custom_call.1} parent=11 // pred_check_branch
          %170 = sbr.rel (%p168) target = $region16
        $region15: #{tpu_custom_call.1} parent=11 // pred_region
          _
        $region16: #{tpu_custom_call.1} parent=11 // pred_fallthru
          _
        // Predicated region
        $region17: #{tpu_custom_call.1} parent=11 // pred_check
          %p171 = pneg %p85
        $region18: #{tpu_custom_call.1} parent=11 // pred_check_branch
          %173 = sbr.rel (%p171) target = $region20
        $region19: #{tpu_custom_call.1} parent=11 // pred_region
          _
        $region20: #{tpu_custom_call.1} parent=11 // pred_fallthru
          _
        // Predicated region
        $region21: #{tpu_custom_call.1} parent=11 // pred_check
          %p174 = pneg %p106
        $region22: #{tpu_custom_call.1} parent=11 // pred_check_branch
          %176 = sbr.rel (%p174) target = $region24
        $region23: #{tpu_custom_call.1} parent=11 // pred_region
          _
        $region24: #{tpu_custom_call.1} parent=11 // pred_fallthru
          _
        // Predicated region
        $region25: #{tpu_custom_call.1} parent=11 // pred_check
          %p177 = pneg %p127
        $region26: #{tpu_custom_call.1} parent=11 // pred_check_branch
          %179 = sbr.rel (%p177) target = $region28
        $region27: #{tpu_custom_call.1} parent=11 // pred_region
          _
        $region28: #{tpu_custom_call.1} parent=11 // pred_fallthru
          _
      $region12: #{tpu_custom_call.1} parent=5 // pred_fallthru
        _
      %p180 = scmp.lt.s32.totalorder %s17, 2
      // Predicated region
      $region29: #{tpu_custom_call.1} parent=5 // pred_check
        %p181 = pneg %p180
      $region30: #{tpu_custom_call.1} parent=5 // pred_check_branch
        %183 = sbr.rel (%p181) target = $region32
      $region31: #{tpu_custom_call.1} parent=5 // pred_region
        // Predicated region
        $region33: #{tpu_custom_call.1} parent=31 // pred_check
          %p184 = pneg %p37
        $region34: #{tpu_custom_call.1} parent=31 // pred_check_branch
          %186 = sbr.rel (%p184) target = $region36
        $region35: #{tpu_custom_call.1} parent=31 // pred_region
          %s187 = sand.u32 %s27, 1
          %s188 = scalar_lea.sflag [#allocation3], %s187
          %s189 = sand.u32 %s27, 1
          %s190 = smul.addr %s189, 128
          %s191 = scalar_lea.vmem [#allocation2], %s190
          %193 = vsyncadd %s188, 0
          %s194 = smul.addr %s17, 16
          %s195 = smul.addr %s194, 8
          %s196 = scalar_lea.hbm %s0, %s195
          %s197 = sshll.u32 %s196, 4
          %s198 = int_to_ptr.hbm [resolvable:$true] %s197
          %s199 = sshll.u32 %s191, 4
          %s200 = int_to_ptr.vmem [resolvable:$true] %s199
          %205 = dma.hbm_to_vmem [thread:$0]  %s198, 2048, %s200, %s188, 256, 256, 16
        $region36: #{tpu_custom_call.1} parent=31 // pred_fallthru
          _
      $region32: #{tpu_custom_call.1} parent=5 // pred_fallthru
        _
      %p206 = scmp.le.s32.totalorder 1, %s17
      %p207 = scmp.lt.s32.totalorder %s17, 3
      %p208 = pnand %p206, %p207
      %p209 = pneg %p208
      // Predicated region
      $region37: #{tpu_custom_call.1} parent=5 // pred_check
        _
      $region38: #{tpu_custom_call.1} parent=5 // pred_check_branch
        %211 = sbr.rel (%p208) target = $region40
      $region39: #{tpu_custom_call.1} parent=5 // pred_region
        %s212 = ssub.s32 %s17, 1
        %s213 = sand.u32 %s30, 1
        %s214 = scalar_lea.sflag [#allocation3], %s213
        %s215 = sand.u32 %s30, 1
        %s216 = smul.addr %s215, 128
        %s217 = scalar_lea.vmem [#allocation2], %s216
        // Predicated region
        $region41: #{tpu_custom_call.1} parent=39 // pred_check
          %p218 = pneg %p43
        $region42: #{tpu_custom_call.1} parent=39 // pred_check_branch
          %220 = sbr.rel (%p218) target = $region44
        $region43: #{tpu_custom_call.1} parent=39 // pred_region
          %222 = dma.done %s214, 2048
        $region44: #{tpu_custom_call.1} parent=39 // pred_fallthru
          _
        %s223 = sand.u32 %s30, 1
        %s224 = scalar_lea.sflag [#allocation3], %s223
        %s225 = sand.u32 %s30, 1
        %s226 = smul.addr %s225, 128
        %s227 = scalar_lea.vmem [#allocation2], %s226
        %p228 = pneg %p43
        %p229 = pneg %p40
        %p230 = pneg %p64
        %p231 = pneg %p61
        %p232 = pneg %p85
        %p233 = pneg %p82
        %p234 = pneg %p106
        %p235 = pneg %p103
        %p236 = pneg %p127
        %p237 = pneg %p124
        %p238 = pneg %p153
        %p239 = pneg %p150
        %s240 = sand.u32 %s140, 1
        %s241 = scalar_lea.sflag [#allocation4], %s240
        %s242 = sand.u32 %s140, 1
        %s243 = smul.addr %s242, 128
        %s244 = scalar_lea.vmem [#allocation5], %s243
        %v245 = vld [vmem:[%s217] sm:$0xff]
        %v246 = vld [vmem:[%s217 + $0x8] sm:$0xff]
        %v247 = vld [vmem:[%s217 + $0x10] sm:$0xff]
        %v248 = vld [vmem:[%s217 + $0x18] sm:$0xff]
        %v249 = vld [vmem:[%s217 + $0x20] sm:$0xff]
        %v250 = vld [vmem:[%s217 + $0x28] sm:$0xff]
        %v251 = vld [vmem:[%s217 + $0x30] sm:$0xff]
        %v252 = vld [vmem:[%s217 + $0x38] sm:$0xff]
        %v253 = vld [vmem:[%s217 + $0x40] sm:$0xff]
        %v254 = vld [vmem:[%s217 + $0x48] sm:$0xff]
        %v255 = vld [vmem:[%s217 + $0x50] sm:$0xff]
        %v256 = vld [vmem:[%s217 + $0x58] sm:$0xff]
        %v257 = vld [vmem:[%s217 + $0x60] sm:$0xff]
        %v258 = vld [vmem:[%s217 + $0x68] sm:$0xff]
        %v259 = vld [vmem:[%s217 + $0x70] sm:$0xff]
        %v260 = vld [vmem:[%s217 + $0x78] sm:$0xff]
        %v261 = vadd.f32 %v245, %v246
        %262 = vadd.xlane.f32.xlu0 %v261
        %v263 = vpop.xlane.xlu0 %262
        %v264 = vadd.f32 %v247, %v248
        %265 = vadd.xlane.f32.xlu0 %v264
        %v266 = vpop.xlane.xlu0 %265
        %v267 = vadd.f32 %v249, %v250
        %268 = vadd.xlane.f32.xlu0 %v267
        %v269 = vpop.xlane.xlu0 %268
        %v270 = vadd.f32 %v251, %v252
        %271 = vadd.xlane.f32.xlu0 %v270
        %v272 = vpop.xlane.xlu0 %271
        %v273 = vadd.f32 %v253, %v254
        %274 = vadd.xlane.f32.xlu0 %v273
        %v275 = vpop.xlane.xlu0 %274
        %v276 = vadd.f32 %v255, %v256
        %277 = vadd.xlane.f32.xlu0 %v276
        %v278 = vpop.xlane.xlu0 %277
        %v279 = vadd.f32 %v257, %v258
        %280 = vadd.xlane.f32.xlu0 %v279
        %v281 = vpop.xlane.xlu0 %280
        %v282 = vadd.f32 %v259, %v260
        %283 = vadd.xlane.f32.xlu0 %v282
        %v284 = vpop.xlane.xlu0 %283
        %v285 = vmul.f32 %v263, 0.00390625
        %v286 = vmul.f32 %v266, 0.00390625
        %v287 = vmul.f32 %v269, 0.00390625
        %v288 = vmul.f32 %v272, 0.00390625
        %v289 = vmul.f32 %v275, 0.00390625
        %v290 = vmul.f32 %v278, 0.00390625
        %v291 = vmul.f32 %v281, 0.00390625
        %v292 = vmul.f32 %v284, 0.00390625
        %v293 = vld [vmem:[%s1] sm:$0xff]
        %v294 = vld [vmem:[%s1 + $0x8] sm:$0xff]
        %v295 = vld [vmem:[%s1 + $0x10] sm:$0xff]
        %v296 = vld [vmem:[%s1 + $0x18] sm:$0xff]
        %v297 = vld [vmem:[%s1 + $0x20] sm:$0xff]
        %v298 = vld [vmem:[%s1 + $0x28] sm:$0xff]
        %v299 = vld [vmem:[%s1 + $0x30] sm:$0xff]
        %v300 = vld [vmem:[%s1 + $0x38] sm:$0xff]
        %v301 = vld [vmem:[%s3] sm:$0xf]
        %v302 = vld [vmem:[%s2] sm:$0x1]
        %v303 = vld [vmem:[%s4] sm:$0x1]
        %v312 = vlaneseq
        %v313 = vand.u32 %v312, 127
        %v314 = vperm.slane %v285, %v313
        %v315 = vadd.s32 %v313, 4294967288
        %v316 = vperm.slane %v286, %v315
        %vm317 = vcmask 130112
        %v318 = vsel %vm317, %v316, %v314
        %v319 = vadd.s32 %v313, 4294967280
        %v320 = vperm.slane %v287, %v319
        %vm321 = vcmask 195712
        %v322 = vsel %vm321, %v320, %v318
        %v323 = vadd.s32 %v313, 4294967272
        %v324 = vperm.slane %v288, %v323
        %vm325 = vcmask 261312
        %v326 = vsel %vm325, %v324, %v322
        %v327 = vadd.s32 %v313, 4294967264
        %v328 = vperm.slane %v289, %v327
        %vm329 = vcmask 326912
        %v330 = vsel %vm329, %v328, %v326
        %v331 = vadd.s32 %v313, 4294967256
        %v332 = vperm.slane %v290, %v331
        %vm333 = vcmask 392512
        %v334 = vsel %vm333, %v332, %v330
        %v335 = vadd.s32 %v313, 4294967248
        %v336 = vperm.slane %v291, %v335
        %vm337 = vcmask 458112
        %v338 = vsel %vm337, %v336, %v334
        %v339 = vadd.s32 %v313, 4294967240
        %v340 = vperm.slane %v292, %v339
        %vm341 = vcmask 523712
        %v342 = vsel %vm341, %v340, %v338
        %vm343 = vcmask 523264
        %v344 = vsel %vm343, %v342, 0
        %346 = vmatpush.msra.mxu0 0.0
        %347 = vmatpush.msra.mxu0 0.0
        %348 = vmatpush.msra.mxu0 0.0
        %349 = vmatpush.msra.mxu0 0.0
        %350 = vmatpush.msra.mxu0 0.0
        %351 = vmatpush.msra.mxu0 0.0
        %352 = vmatpush.msra.mxu0 0.0
        %353 = vmatpush.msra.mxu0 0.0
        %354 = vmatpush.msra.mxu0 %v300
        %355 = vmatpush.msra.mxu0 %v299
        %356 = vmatpush.msra.mxu0 %v298
        %357 = vmatpush.msra.mxu0 %v297
        %358 = vmatpush.msra.mxu0 %v296
        %359 = vmatpush.msra.mxu0 %v295
        %360 = vmatpush.msra.mxu0 %v294
        %361 = vmatpush.msra.mxu0 %v293
        %362 = vmatmul.f32.gmra.mxu0 %v344
        %v363 = vpop.f32.mrf.mxu0
        %v364 = vadd.f32 %v302, %v363
        %365 = vdwg.mxu0
        %v366 = vmax.f32 %v364, 0.0
        %vm367 = vcmask 31744
        %v369 = vsel %vm367, %v366, 0
        %vm371 = vcmask 1043456
        %v373 = vsel %vm371, %v301, 0
        %375 = vmatpush.msra.mxu0 0.0
        %376 = vmatpush.msra.mxu0 0.0
        %377 = vmatpush.msra.mxu0 0.0
        %378 = vmatpush.msra.mxu0 0.0
        %379 = vmatpush.msra.mxu0 0.0
        %380 = vmatpush.msra.mxu0 0.0
        %381 = vmatpush.msra.mxu0 0.0
        %382 = vmatpush.msra.mxu0 0.0
        %383 = vmatpush.msra.mxu0 0.0
        %384 = vmatpush.msra.mxu0 0.0
        %385 = vmatpush.msra.mxu0 0.0
        %386 = vmatpush.msra.mxu0 0.0
        %387 = vmatpush.msra.mxu0 0.0
        %388 = vmatpush.msra.mxu0 0.0
        %389 = vmatpush.msra.mxu0 0.0
        %390 = vmatpush.msra.mxu0 %v373
        %391 = vmatmul.f32.gmra.mxu0 %v369
        %v392 = vpop.f32.mrf.mxu0
        %v393 = vadd.f32 %v303, %v392
        %394 = vdwg.mxu0
        %v395 = vsub.f32 0.0, %v393
        %v396 = vmul.f32 %v395, 1.442695
        %v397 = vpow.pop %v396
        %v398 = vadd.f32 %v397, 1.0
        %v399 = vrcp.pop %v398
        %v400 = vmul.f32 %v398, %v399
        %v401 = vsub.f32 1.0, %v400
        %v402 = vmul.f32 %v399, %v401
        %v403 = vadd.f32 %v399, %v402
        %vm404 = vweird.f32 %v398
        %vm405 = vweird.f32 %v399
        %vm406 = vmor %vm404, %vm405
        %v407 = vsel %vm406, %v399, %v403
        %v408 = vand.u32 2147483647, %v398
        %vm409 = vcmp.eq.f32.partialorder %v408, 8.507059e+37
        %v410 = vand.u32 %v398, 2147483648
        %v411 = vor.u32 1.1754944e-38, %v410
        %v412 = vsel %vm409, %v411, %v407
        %v413 = vmul.f32 1.0, %v412
        %v414 = vperm.slane %v413, 0
        %v415 = vlaneseq
        %v416 = vshrl.u32 %v415, 7
        %418 = vset.pattern.permute.xlu0 %v416
        %419 = vperm.xlu0 %418, %v414
        %v420 = vpop.permute.xlu0 %419
        %v421 = vlaneseq
        %v422 = vshrl.u32 %v421, 7
        %v423 = vadd.s32 %v422, 8
        %424 = vset.pattern.permute.xlu0 %v423
        %425 = vperm.xlu0 %424, %v414
        %v426 = vpop.permute.xlu0 %425
        %v427 = vlaneseq
        %v428 = vshrl.u32 %v427, 7
        %v429 = vadd.s32 %v428, 16
        %430 = vset.pattern.permute.xlu0 %v429
        %431 = vperm.xlu0 %430, %v414
        %v432 = vpop.permute.xlu0 %431
        %v433 = vlaneseq
        %v434 = vshrl.u32 %v433, 7
        %v435 = vadd.s32 %v434, 24
        %436 = vset.pattern.permute.xlu0 %v435
        %437 = vperm.xlu0 %436, %v414
        %v438 = vpop.permute.xlu0 %437
        %v439 = vlaneseq
        %v440 = vshrl.u32 %v439, 7
        %v441 = vadd.s32 %v440, 32
        %442 = vset.pattern.permute.xlu0 %v441
        %443 = vperm.xlu0 %442, %v414
        %v444 = vpop.permute.xlu0 %443
        %v445 = vlaneseq
        %v446 = vshrl.u32 %v445, 7
        %v447 = vadd.s32 %v446, 40
        %448 = vset.pattern.permute.xlu0 %v447
        %449 = vperm.xlu0 %448, %v414
        %v450 = vpop.permute.xlu0 %449
        %v451 = vlaneseq
        %v452 = vshrl.u32 %v451, 7
        %v453 = vadd.s32 %v452, 48
        %454 = vset.pattern.permute.xlu0 %v453
        %455 = vperm.xlu0 %454, %v414
        %v456 = vpop.permute.xlu0 %455
        %v457 = vlaneseq
        %v458 = vshrl.u32 %v457, 7
        %v459 = vadd.s32 %v458, 56
        %460 = vset.pattern.permute.xlu0 %v459
        %461 = vperm.xlu0 %460, %v414
        %v462 = vpop.permute.xlu0 %461
        %v463 = vmul.f32 %v245, %v420
        %v464 = vmul.f32 %v246, %v420
        %v465 = vmul.f32 %v247, %v426
        %v466 = vmul.f32 %v248, %v426
        %v467 = vmul.f32 %v249, %v432
        %v468 = vmul.f32 %v250, %v432
        %v469 = vmul.f32 %v251, %v438
        %v470 = vmul.f32 %v252, %v438
        %v471 = vmul.f32 %v253, %v444
        %v472 = vmul.f32 %v254, %v444
        %v473 = vmul.f32 %v255, %v450
        %v474 = vmul.f32 %v256, %v450
        %v475 = vmul.f32 %v257, %v456
        %v476 = vmul.f32 %v258, %v456
        %v477 = vmul.f32 %v259, %v462
        %v478 = vmul.f32 %v260, %v462
        %479 = vst [vmem:[%s244] sm:$0xff] %v463
        %480 = vst [vmem:[%s244 + $0x8] sm:$0xff] %v464
        %481 = vst [vmem:[%s244 + $0x10] sm:$0xff] %v465
        %482 = vst [vmem:[%s244 + $0x18] sm:$0xff] %v466
        %483 = vst [vmem:[%s244 + $0x20] sm:$0xff] %v467
        %484 = vst [vmem:[%s244 + $0x28] sm:$0xff] %v468
        %485 = vst [vmem:[%s244 + $0x30] sm:$0xff] %v469
        %486 = vst [vmem:[%s244 + $0x38] sm:$0xff] %v470
        %487 = vst [vmem:[%s244 + $0x40] sm:$0xff] %v471
        %488 = vst [vmem:[%s244 + $0x48] sm:$0xff] %v472
        %489 = vst [vmem:[%s244 + $0x50] sm:$0xff] %v473
        %490 = vst [vmem:[%s244 + $0x58] sm:$0xff] %v474
        %491 = vst [vmem:[%s244 + $0x60] sm:$0xff] %v475
        %492 = vst [vmem:[%s244 + $0x68] sm:$0xff] %v476
        %493 = vst [vmem:[%s244 + $0x70] sm:$0xff] %v477
        %494 = vst [vmem:[%s244 + $0x78] sm:$0xff] %v478
        %s495 = sand.u32 %s140, 1
        %s496 = scalar_lea.sflag [#allocation4], %s495
        %s497 = sand.u32 %s140, 1
        %s498 = smul.addr %s497, 128
        %s499 = scalar_lea.vmem [#allocation5], %s498
        // Predicated region
        $region45: #{tpu_custom_call.1} parent=39 // pred_check
          %p500 = pneg %p150
        $region46: #{tpu_custom_call.1} parent=39 // pred_check_branch
          %502 = sbr.rel (%p500) target = $region48
        $region47: #{tpu_custom_call.1} parent=39 // pred_region
          %504 = vsyncadd %s496, 0
          %s505 = smul.addr %s22, 16
          %s506 = smul.addr %s505, 8
          %s507 = scalar_lea.hbm %s5, %s506
          %s508 = sshll.u32 %s499, 4
          %s509 = int_to_ptr.vmem [resolvable:$true] %s508
          %s510 = sshll.u32 %s507, 4
          %s511 = int_to_ptr.hbm [resolvable:$true] %s510
          %516 = dma.vmem_to_hbm [thread:$0]  %s509, 2048, %s511, %s496, 256, 256, 16
        $region48: #{tpu_custom_call.1} parent=39 // pred_fallthru
          _
      $region40: #{tpu_custom_call.1} parent=5 // pred_fallthru
        _
      %p517 = scmp.le.s32.totalorder 2, %s17
      // Predicated region
      $region49: #{tpu_custom_call.1} parent=5 // pred_check
        %p518 = pneg %p517
      $region50: #{tpu_custom_call.1} parent=5 // pred_check_branch
        %520 = sbr.rel (%p518) target = $region52
      $region51: #{tpu_custom_call.1} parent=5 // pred_region
        %s521 = ssub.s32 %s17, 2
        // Predicated region
        $region53: #{tpu_custom_call.1} parent=51 // pred_check
          %p522 = pneg %p156
        $region54: #{tpu_custom_call.1} parent=51 // pred_check_branch
          %524 = sbr.rel (%p522) target = $region56
        $region55: #{tpu_custom_call.1} parent=51 // pred_region
          %s525 = sand.u32 %s141, 1
          %s526 = scalar_lea.sflag [#allocation4], %s525
          %s527 = sand.u32 %s141, 1
          %s528 = smul.addr %s527, 128
          %s529 = scalar_lea.vmem [#allocation5], %s528
          %531 = dma.done %s526, 2048
        $region56: #{tpu_custom_call.1} parent=51 // pred_fallthru
          _
      $region52: #{tpu_custom_call.1} parent=5 // pred_fallthru
        _
    $region6: #{tpu_custom_call.1} parent=1 // loop_footer
      %s21 = sadd.s32 1, %s17
    $region7: #{tpu_custom_call.1} parent=1 // loop_footer_branch
      %16 = sbr.rel target = $region3
    $region8: #{tpu_custom_call.1} parent=1 // loop_exit
      _
    %532 = vsyncpa [#allocation3], 1
    %s533 = scalar_lea.sflag [#allocation3], 1
    %534 = vsyncpa %s533, 1
    %535 = vsyncpa [#allocation4], 1
    %s536 = scalar_lea.sflag [#allocation4], 1
    %537 = vsyncpa %s536, 1

</llo_original>
